<compile_context>
chip_gen: v7x
topology: tpu7x:2x2x1
jax: 0.10.0
libtpu: 0.0.40
codegen_flags: <defaults>
</compile_context>

<pallas_src>
import functools

import jax
import jax.numpy as jnp
from jax.experimental import pallas as pl
from jax.experimental.pallas import tpu as pltpu


def _round_up(x, m):
    return (x + m - 1) // m * m


def make_param_layout(input_dims, h1, h2, n_actions):
    """Row/col placement of each (pre-transposed) weight/bias in one packed buffer.

    Returns (layout, buffer_shape) where layout[name] = (row_start, n_rows, n_cols).
    Row starts are padded to multiples of 8 (sublane) and the buffer lane width
    is padded to a multiple of 128 so every section is tile-aligned.
    """
    entries = (
        ("w1", input_dims, h1),
        ("b1", 1, h1),
        ("w2", h1, h2),
        ("b2", 1, h2),
        ("wh", h2, 2 * n_actions),   # fused [mu | log_std] head weight
        ("bh", 1, 2 * n_actions),    # fused [mu | log_std] head bias
    )
    layout = {}
    row = 0
    max_w = 0
    for name, n_rows, n_cols in entries:
        layout[name] = (row, n_rows, n_cols)
        row = _round_up(row + n_rows, 8)
        max_w = max(max_w, n_cols)
    shape = (_round_up(row, 8), _round_up(max_w, 128))
    return layout, shape


def pack_params(params, input_dims, hidden_sizes, n_actions):
    """One-time packing: fuse mu/log_std heads and place everything in one buffer."""
    h1, h2 = hidden_sizes
    layout, shape = make_param_layout(input_dims, h1, h2, n_actions)
    tensors = {
        "w1": params["w1"], "b1": params["b1"],
        "w2": params["w2"], "b2": params["b2"],
        "wh": jnp.concatenate([params["wmu"], params["wls"]], axis=1),
        "bh": jnp.concatenate([params["bmu"], params["bls"]], axis=1),
    }
    buf = jnp.zeros(shape, jnp.float32)
    for name, (r, h, w) in layout.items():
        buf = buf.at[r:r + h, :w].set(tensors[name].astype(jnp.float32))
    return buf


def actor_forward_kernel(x_ref, p_ref, out_ref, *, layout, n_actions):
    def sect(name):
        r, h, w = layout[name]
        return p_ref[r:r + h, :w]           # static slice of the packed VMEM buffer

    x = x_ref[...]

    # Hidden layer 1: Linear + ReLU
    h = jnp.dot(x, sect("w1"), preferred_element_type=jnp.float32) + sect("b1")
    h = jnp.maximum(h, 0.0)

    # Hidden layer 2: Linear + ReLU (mlp output_activation is ReLU too)
    h = jnp.dot(h, sect("w2"), preferred_element_type=jnp.float32) + sect("b2")
    h = jnp.maximum(h, 0.0)

    # Fused heads: columns [0, n_actions) = mu, [n_actions, 2*n_actions) = log_std.
    head = jnp.dot(h, sect("wh"), preferred_element_type=jnp.float32) + sect("bh")

    # std half: clamp then exp; mu half passes through unchanged. Single store.
    std = jnp.exp(jnp.clip(head, -20.0, 2.0))
    col = jax.lax.broadcasted_iota(jnp.int32, head.shape, 1)
    out_ref[...] = jnp.where(col < n_actions, head, std).astype(out_ref.dtype)


def actor_forward(state, packed_params, *, input_dims, hidden_sizes, n_actions):
    """state: [B, input_dims] f32. packed_params: buffer built by pack_params()."""
    B = state.shape[0]
    h1, h2 = hidden_sizes
    layout, _ = make_param_layout(input_dims, h1, h2, n_actions)

    vmem = pl.BlockSpec(memory_space=pltpu.MemorySpace.VMEM)
    flops = 2 * B * (input_dims * h1 + h1 * h2 + h2 * 2 * n_actions)
    bytes_accessed = (state.size + packed_params.size + B * 2 * n_actions) * 4

    out = pl.pallas_call(
        functools.partial(actor_forward_kernel, layout=layout, n_actions=n_actions),
        out_shape=jax.ShapeDtypeStruct((B, 2 * n_actions), jnp.float32),
        in_specs=[vmem, vmem],
        out_specs=vmem,
        cost_estimate=pl.CostEstimate(
            flops=flops,
            transcendentals=B * 2 * n_actions,
            bytes_accessed=bytes_accessed,
        ),
    )(state, packed_params)

    mu = out[:, :n_actions]
    std = out[:, n_actions:]
    return mu, std


def init_params(key, input_dims, hidden_sizes, n_actions):
    """Deterministic init mimicking PyTorch nn.Linear default (U[-1/sqrt(fan_in), +])."""
    sizes = [input_dims] + list(hidden_sizes)
    params = {}
    keys = jax.random.split(key, 8)

    def linear(kw, kb, fan_in, fan_out):
        bound = 1.0 / jnp.sqrt(fan_in)
        w = jax.random.uniform(kw, (fan_in, fan_out), jnp.float32, -bound, bound)
        b = jax.random.uniform(kb, (1, fan_out), jnp.float32, -bound, bound)
        return w, b

    params["w1"], params["b1"] = linear(keys[0], keys[1], sizes[0], sizes[1])
    params["w2"], params["b2"] = linear(keys[2], keys[3], sizes[1], sizes[2])
    params["wmu"], params["bmu"] = linear(keys[4], keys[5], sizes[2], n_actions)
    params["wls"], params["bls"] = linear(keys[6], keys[7], sizes[2], n_actions)
    return params


def reference_forward(state, p):
    h = jnp.maximum(state @ p["w1"] + p["b1"], 0.0)
    h = jnp.maximum(h @ p["w2"] + p["b2"], 0.0)
    mu = h @ p["wmu"] + p["bmu"]
    log_std = jnp.clip(h @ p["wls"] + p["bls"], -20.0, 2.0)
    return mu, jnp.exp(log_std)


if __name__ == "__main__":
    # Small shapes consistent with a 2-DOF SAC actor: state dim 8, two hidden
    # layers of 32, 2 actions, batch of 8.
    batch = 8
    input_dims = 8
    hidden_sizes = (32, 32)
    n_actions = 2

    key = jax.random.PRNGKey(0)
    kp, kx = jax.random.split(key)
    params = init_params(kp, input_dims, hidden_sizes, n_actions)
    packed = pack_params(params, input_dims, hidden_sizes, n_actions)
    state = jax.random.normal(kx, (batch, input_dims), dtype=jnp.float32)

    mu, std = actor_forward(state, packed,
                            input_dims=input_dims,
                            hidden_sizes=hidden_sizes,
                            n_actions=n_actions)
    jax.block_until_ready((mu, std))

    mu_ref, std_ref = reference_forward(state, params)
    assert jnp.allclose(mu, mu_ref, atol=1e-5, rtol=1e-5)
    assert jnp.allclose(std, std_ref, atol=1e-5, rtol=1e-5)

    # TODO(synk): sample_normal / evaluate need RNG sampling (Normal.rsample);
    # only the deterministic forward() hot path is implemented in-kernel.
    print("KERNEL_OK")
</pallas_src>

<mosaic_0001>
module attributes {stable_mosaic.version = 11 : i64} {
  func.func @actor_forward_kernel(%arg0: memref<8x8xf32, #tpu.memory_space<vmem>>, %arg1: memref<96x128xf32, #tpu.memory_space<vmem>>, %arg2: memref<8x4xf32, #tpu.memory_space<vmem>>) attributes {dimension_semantics = [], scalar_prefetch = 0 : i64, scratch_operands = 0 : i64, tpu.core_type = #tpu.core_type<tc>} {
    %c0 = arith.constant 0 : index
    %c0_0 = arith.constant 0 : index
    %0 = vector.load %arg0[%c0, %c0_0] : memref<8x8xf32, #tpu.memory_space<vmem>>, vector<8x8xf32>
    %c0_1 = arith.constant 0 : index
    %c0_2 = arith.constant 0 : index
    %1 = vector.load %arg1[%c0_1, %c0_2] : memref<96x128xf32, #tpu.memory_space<vmem>>, vector<8x32xf32>
    %cst = arith.constant dense<0.000000e+00> : vector<8x32xf32>
    %2 = tpu.matmul %0, %1, %cst {dimension_numbers = #tpu.dot_dimension_numbers<[1], [0], [0], [1], [0, 0, 1, 1], [], []>} : vector<8x8xf32>, vector<8x32xf32>, vector<8x32xf32> -> vector<8x32xf32>
    %c8 = arith.constant 8 : index
    %c0_3 = arith.constant 0 : index
    %3 = vector.load %arg1[%c8, %c0_3] : memref<96x128xf32, #tpu.memory_space<vmem>>, vector<1x32xf32>
    %4 = vector.broadcast %3 : vector<1x32xf32> to vector<8x32xf32>
    %5 = arith.addf %2, %4 : vector<8x32xf32>
    %cst_4 = arith.constant 0.000000e+00 : f32
    %6 = vector.broadcast %cst_4 : f32 to vector<8x32xf32>
    %7 = arith.maximumf %5, %6 : vector<8x32xf32>
    %c16 = arith.constant 16 : index
    %c0_5 = arith.constant 0 : index
    %8 = vector.load %arg1[%c16, %c0_5] : memref<96x128xf32, #tpu.memory_space<vmem>>, vector<32x32xf32>
    %cst_6 = arith.constant dense<0.000000e+00> : vector<8x32xf32>
    %9 = tpu.matmul %7, %8, %cst_6 {dimension_numbers = #tpu.dot_dimension_numbers<[1], [0], [0], [1], [0, 0, 1, 1], [], []>} : vector<8x32xf32>, vector<32x32xf32>, vector<8x32xf32> -> vector<8x32xf32>
    %c48 = arith.constant 48 : index
    %c0_7 = arith.constant 0 : index
    %10 = vector.load %arg1[%c48, %c0_7] : memref<96x128xf32, #tpu.memory_space<vmem>>, vector<1x32xf32>
    %11 = vector.broadcast %10 : vector<1x32xf32> to vector<8x32xf32>
    %12 = arith.addf %9, %11 : vector<8x32xf32>
    %cst_8 = arith.constant 0.000000e+00 : f32
    %13 = vector.broadcast %cst_8 : f32 to vector<8x32xf32>
    %14 = arith.maximumf %12, %13 : vector<8x32xf32>
    %c56 = arith.constant 56 : index
    %c0_9 = arith.constant 0 : index
    %15 = vector.load %arg1[%c56, %c0_9] : memref<96x128xf32, #tpu.memory_space<vmem>>, vector<32x4xf32>
    %cst_10 = arith.constant dense<0.000000e+00> : vector<8x4xf32>
    %16 = tpu.matmul %14, %15, %cst_10 {dimension_numbers = #tpu.dot_dimension_numbers<[1], [0], [0], [1], [0, 0, 1, 1], [], []>} : vector<8x32xf32>, vector<32x4xf32>, vector<8x4xf32> -> vector<8x4xf32>
    %c88 = arith.constant 88 : index
    %c0_11 = arith.constant 0 : index
    %17 = vector.load %arg1[%c88, %c0_11] : memref<96x128xf32, #tpu.memory_space<vmem>>, vector<1x4xf32>
    %18 = vector.broadcast %17 : vector<1x4xf32> to vector<8x4xf32>
    %19 = arith.addf %16, %18 : vector<8x4xf32>
    %cst_12 = arith.constant -2.000000e+01 : f32
    %cst_13 = arith.constant 2.000000e+00 : f32
    %20 = vector.broadcast %cst_12 : f32 to vector<8x4xf32>
    %21 = arith.maximumf %20, %19 : vector<8x4xf32>
    %22 = vector.broadcast %cst_13 : f32 to vector<8x4xf32>
    %23 = arith.minimumf %22, %21 : vector<8x4xf32>
    %24 = math.exp %23 : vector<8x4xf32>
    %25 = tpu.iota {dimensions = array<i32: 1>} : vector<8x4xi32>
    %c2_i32 = arith.constant 2 : i32
    %26 = vector.broadcast %c2_i32 : i32 to vector<8x4xi32>
    %27 = arith.cmpi slt, %25, %26 : vector<8x4xi32>
    %28 = arith.select %27, %19, %24 : vector<8x4xi1>, vector<8x4xf32>
    %c0_14 = arith.constant 0 : index
    %c0_15 = arith.constant 0 : index
    %29 = vector.load %arg2[%c0_14, %c0_15] : memref<8x4xf32, #tpu.memory_space<vmem>>, vector<8x4xf32>
    tpu.vector_store %arg2[%c0_14, %c0_15], %28 {strides = array<i32>} : memref<8x4xf32, #tpu.memory_space<vmem>>, vector<8x4xf32>,
    return
  }
}

</mosaic_0001>

<llo_original>
// kernel: tpu_custom_call.1
$region0: #{tpu_custom_call.1}
  #allocation0 [shape = 'u32[]', space=smem, size = 0x4, offset = 0x4, fixed_abs, tag = 'smem constant byte address 0x4 - core index']
  #allocation1 [shape = 'u32[144,128]{1,0:T(1,128)}', space=vmem, size = 0x12000, scoped, tag = 'internal scratch']
  %s0 = inlined_call_operand.hbm [shape: f32[8,8], index: 0, kind: input, shape index: {}]
  %s1 = inlined_call_operand.hbm [shape: f32[96,128], index: 1, kind: input, shape index: {}]
  %s2 = inlined_call_operand.vmem [shape: f32[8,4], index: 2, kind: output, shape index: {}]
  %s3 = sld [smem:[#allocation0]]
  $region26: #{tpu_custom_call.1} parent=0
    _
  %s5 = ssub.s32 1, %s3
  %s6 = scalar_select 0, %s5, %s3
  $region1: #{tpu_custom_call.1} parent=0
    #allocation2 [shape = 'u8[4096]{0}', space=vmem, size = 0x1000, scoped, tag = 'input window, operand 0, single buffered']
    #allocation3 [shape = 's32[1]{0}', space=sflag, size = 0x4, scoped, tag = 'scoped memory for tpu_custom_call.1']
    #allocation4 [shape = 'u8[49152]{0}', space=vmem, size = 0xc000, scoped, tag = 'input window, operand 1, single buffered']
    #allocation5 [shape = 's32[1]{0}', space=sflag, size = 0x4, scoped, tag = 'scoped memory for tpu_custom_call.1']
    %7 = vsyncpa [#allocation3], 0
    %8 = vsyncpa [#allocation5], 0
    // Predicated region
    $region2: #{tpu_custom_call.1} parent=1 // pred_check
      _
    $region3: #{tpu_custom_call.1} parent=1 // pred_check_branch
      %10 = sbr.rel (0) target = $region5
    $region4: #{tpu_custom_call.1} parent=1 // pred_region
      %s12 = ssub.s32 128, 128
      %13 = vsyncadd [#allocation3], %s12
      %s15 = sshll.u32 [#allocation2], 4
      %s16 = int_to_ptr.vmem [resolvable:$true] %s15
      %18 = dma.hbm_to_vmem [thread:$0]  %s0, 128, %s16, [#allocation3]
    $region5: #{tpu_custom_call.1} parent=1 // pred_fallthru
      _
    // Predicated region
    $region6: #{tpu_custom_call.1} parent=1 // pred_check
      _
    $region7: #{tpu_custom_call.1} parent=1 // pred_check_branch
      %20 = sbr.rel (0) target = $region9
    $region8: #{tpu_custom_call.1} parent=1 // pred_region
      %s22 = ssub.s32 1536, 1536
      %23 = vsyncadd [#allocation5], %s22
      %s24 = sshll.u32 [#allocation4], 4
      %s25 = int_to_ptr.vmem [resolvable:$true] %s24
      %30 = dma.hbm_to_vmem [thread:$0]  %s1, 1536, %s25, [#allocation5], 128, 128, 8
    $region9: #{tpu_custom_call.1} parent=1 // pred_fallthru
      _
    // Predicated region
    $region10: #{tpu_custom_call.1} parent=1 // pred_check
      _
    $region11: #{tpu_custom_call.1} parent=1 // pred_check_branch
      %32 = sbr.rel (0) target = $region13
    $region12: #{tpu_custom_call.1} parent=1 // pred_region
      %33 = dma.done [#allocation3], 128
    $region13: #{tpu_custom_call.1} parent=1 // pred_fallthru
      _
    // Predicated region
    $region14: #{tpu_custom_call.1} parent=1 // pred_check
      _
    $region15: #{tpu_custom_call.1} parent=1 // pred_check_branch
      %35 = sbr.rel (0) target = $region17
    $region16: #{tpu_custom_call.1} parent=1 // pred_region
      %36 = dma.done [#allocation5], 1536
    $region17: #{tpu_custom_call.1} parent=1 // pred_fallthru
      _
    %v37 = vld [vmem:[#allocation2] sm:$0xff]
    %v38 = vld [vmem:[#allocation4] sm:$0xff]
    %v39 = vld [vmem:[#allocation4 + $0x8] sm:$0x1]
    %v40 = vlaneseq
    %v41 = vshrl.u32 %v40, 7
    %v42 = vsub.s32 0, %v41
    %v43 = vrot.slane %v39, %v42
    %vm44 = vcmask 64512
    %v46 = vsel %vm44, %v37, 0
    %48 = vmatprep.subr.mxu0 0.0
    %49 = vmatpush1.msra.mxu0 %v38
    %50 = vmatprep.subr.mxu0 0.0
    %51 = vmatpush1.msra.mxu0 0.0
    %52 = vmatprep.subr.mxu0 0.0
    %53 = vmatpush1.msra.mxu0 0.0
    %54 = vmatprep.subr.mxu0 0.0
    %55 = vmatpush1.msra.mxu0 0.0
    %56 = vmatprep.subr.mxu0 0.0
    %57 = vmatpush1.msra.mxu0 0.0
    %58 = vmatprep.subr.mxu0 0.0
    %59 = vmatpush1.msra.mxu0 0.0
    %60 = vmatprep.subr.mxu0 0.0
    %61 = vmatpush1.msra.mxu0 0.0
    %62 = vmatprep.subr.mxu0 0.0
    %63 = vmatpush1.msra.mxu0 0.0
    %64 = vmatprep.subr.mxu0 0.0
    %65 = vmatpush1.msra.mxu0 0.0
    %66 = vmatprep.subr.mxu0 0.0
    %67 = vmatpush1.msra.mxu0 0.0
    %68 = vmatprep.subr.mxu0 0.0
    %69 = vmatpush1.msra.mxu0 0.0
    %70 = vmatprep.subr.mxu0 0.0
    %71 = vmatpush1.msra.mxu0 0.0
    %72 = vmatprep.subr.mxu0 0.0
    %73 = vmatpush1.msra.mxu0 0.0
    %74 = vmatprep.subr.mxu0 0.0
    %75 = vmatpush1.msra.mxu0 0.0
    %76 = vmatprep.subr.mxu0 0.0
    %77 = vmatpush1.msra.mxu0 0.0
    %78 = vmatprep.subr.mxu0 0.0
    %79 = vmatpush1.msra.mxu0 0.0
    %80 = vmatprep.subr.mxu0 0.0
    %81 = vmatpush1.msra.mxu0 0.0
    %82 = vmatprep.subr.mxu0 0.0
    %83 = vmatpush1.msra.mxu0 0.0
    %84 = vmatprep.subr.mxu0 0.0
    %85 = vmatpush1.msra.mxu0 0.0
    %86 = vmatprep.subr.mxu0 0.0
    %87 = vmatpush1.msra.mxu0 0.0
    %88 = vmatprep.subr.mxu0 0.0
    %89 = vmatpush1.msra.mxu0 0.0
    %90 = vmatprep.subr.mxu0 0.0
    %91 = vmatpush1.msra.mxu0 0.0
    %92 = vmatprep.subr.mxu0 0.0
    %93 = vmatpush1.msra.mxu0 0.0
    %94 = vmatprep.subr.mxu0 0.0
    %95 = vmatpush1.msra.mxu0 0.0
    %96 = vmatprep.subr.mxu0 0.0
    %97 = vmatpush1.msra.mxu0 0.0
    %98 = vmatprep.subr.mxu0 0.0
    %99 = vmatpush1.msra.mxu0 0.0
    %100 = vmatprep.subr.mxu0 0.0
    %101 = vmatpush1.msra.mxu0 0.0
    %102 = vmatprep.subr.mxu0 0.0
    %103 = vmatpush1.msra.mxu0 0.0
    %104 = vmatprep.subr.mxu0 0.0
    %105 = vmatpush1.msra.mxu0 0.0
    %106 = vmatprep.subr.mxu0 0.0
    %107 = vmatpush1.msra.mxu0 0.0
    %108 = vmatprep.subr.mxu0 0.0
    %109 = vmatpush1.msra.mxu0 0.0
    %110 = vmatprep.subr.mxu0 0.0
    %111 = vmatpush1.msra.mxu0 0.0
    %112 = vmatprep.mubr.f32.mxu0 0.0
    %113 = vmatmul.mubr.f32.gmra.mrb[0].mxu0 %v46
    %v114 = vpop.f32.mrb[0].mxu0
    %v115 = vadd.f32 %v43, %v114
    %v116 = vpop.f32.mrb[0].mxu0
    %117 = vdwg.mxu0
    %v118 = vmax.f32 %v115, 0.0
    %v119 = vld [vmem:[#allocation4 + $0x10] sm:$0xff]
    %v120 = vld [vmem:[#allocation4 + $0x18] sm:$0xff]
    %v121 = vld [vmem:[#allocation4 + $0x20] sm:$0xff]
    %v122 = vld [vmem:[#allocation4 + $0x28] sm:$0xff]
    %v123 = vld [vmem:[#allocation4 + $0x30] sm:$0x1]
    %v124 = vlaneseq
    %v125 = vshrl.u32 %v124, 7
    %v126 = vsub.s32 0, %v125
    %v127 = vrot.slane %v123, %v126
    %vm128 = vcmask 261120
    %v130 = vsel %vm128, %v118, 0
    %132 = vmatprep.subr.mxu0 0.0
    %133 = vmatpush1.msra.mxu0 %v119
    %134 = vmatprep.subr.mxu0 0.0
    %135 = vmatpush1.msra.mxu0 %v120
    %136 = vmatprep.subr.mxu0 0.0
    %137 = vmatpush1.msra.mxu0 %v121
    %138 = vmatprep.subr.mxu0 0.0
    %139 = vmatpush1.msra.mxu0 %v122
    %140 = vmatprep.subr.mxu0 0.0
    %141 = vmatpush1.msra.mxu0 0.0
    %142 = vmatprep.subr.mxu0 0.0
    %143 = vmatpush1.msra.mxu0 0.0
    %144 = vmatprep.subr.mxu0 0.0
    %145 = vmatpush1.msra.mxu0 0.0
    %146 = vmatprep.subr.mxu0 0.0
    %147 = vmatpush1.msra.mxu0 0.0
    %148 = vmatprep.subr.mxu0 0.0
    %149 = vmatpush1.msra.mxu0 0.0
    %150 = vmatprep.subr.mxu0 0.0
    %151 = vmatpush1.msra.mxu0 0.0
    %152 = vmatprep.subr.mxu0 0.0
    %153 = vmatpush1.msra.mxu0 0.0
    %154 = vmatprep.subr.mxu0 0.0
    %155 = vmatpush1.msra.mxu0 0.0
    %156 = vmatprep.subr.mxu0 0.0
    %157 = vmatpush1.msra.mxu0 0.0
    %158 = vmatprep.subr.mxu0 0.0
    %159 = vmatpush1.msra.mxu0 0.0
    %160 = vmatprep.subr.mxu0 0.0
    %161 = vmatpush1.msra.mxu0 0.0
    %162 = vmatprep.subr.mxu0 0.0
    %163 = vmatpush1.msra.mxu0 0.0
    %164 = vmatprep.subr.mxu0 0.0
    %165 = vmatpush1.msra.mxu0 0.0
    %166 = vmatprep.subr.mxu0 0.0
    %167 = vmatpush1.msra.mxu0 0.0
    %168 = vmatprep.subr.mxu0 0.0
    %169 = vmatpush1.msra.mxu0 0.0
    %170 = vmatprep.subr.mxu0 0.0
    %171 = vmatpush1.msra.mxu0 0.0
    %172 = vmatprep.subr.mxu0 0.0
    %173 = vmatpush1.msra.mxu0 0.0
    %174 = vmatprep.subr.mxu0 0.0
    %175 = vmatpush1.msra.mxu0 0.0
    %176 = vmatprep.subr.mxu0 0.0
    %177 = vmatpush1.msra.mxu0 0.0
    %178 = vmatprep.subr.mxu0 0.0
    %179 = vmatpush1.msra.mxu0 0.0
    %180 = vmatprep.subr.mxu0 0.0
    %181 = vmatpush1.msra.mxu0 0.0
    %182 = vmatprep.subr.mxu0 0.0
    %183 = vmatpush1.msra.mxu0 0.0
    %184 = vmatprep.subr.mxu0 0.0
    %185 = vmatpush1.msra.mxu0 0.0
    %186 = vmatprep.subr.mxu0 0.0
    %187 = vmatpush1.msra.mxu0 0.0
    %188 = vmatprep.subr.mxu0 0.0
    %189 = vmatpush1.msra.mxu0 0.0
    %190 = vmatprep.subr.mxu0 0.0
    %191 = vmatpush1.msra.mxu0 0.0
    %192 = vmatprep.subr.mxu0 0.0
    %193 = vmatpush1.msra.mxu0 0.0
    %194 = vmatprep.subr.mxu0 0.0
    %195 = vmatpush1.msra.mxu0 0.0
    %196 = vmatprep.mubr.f32.mxu0 0.0
    %197 = vmatmul.mubr.f32.gmra.mrb[0].mxu0 %v130
    %v198 = vpop.f32.mrb[0].mxu0
    %v199 = vadd.f32 %v127, %v198
    %v200 = vpop.f32.mrb[0].mxu0
    %201 = vdwg.mxu0
    %v202 = vmax.f32 %v199, 0.0
    %v203 = vld [vmem:[#allocation4 + $0x38] sm:$0xff]
    %v204 = vld [vmem:[#allocation4 + $0x40] sm:$0xff]
    %v205 = vld [vmem:[#allocation4 + $0x48] sm:$0xff]
    %v206 = vld [vmem:[#allocation4 + $0x50] sm:$0xff]
    %v207 = vld [vmem:[#allocation4 + $0x58] sm:$0x1]
    %v208 = vlaneseq
    %v209 = vshrl.u32 %v208, 7
    %v210 = vsub.s32 0, %v209
    %v211 = vrot.slane %v207, %v210
    %v213 = vsel %vm128, %v202, 0
    %215 = vmatprep.subr.mxu0 0.0
    %216 = vmatpush1.msra.mxu0 %v203
    %217 = vmatprep.subr.mxu0 0.0
    %218 = vmatpush1.msra.mxu0 %v204
    %219 = vmatprep.subr.mxu0 0.0
    %220 = vmatpush1.msra.mxu0 %v205
    %221 = vmatprep.subr.mxu0 0.0
    %222 = vmatpush1.msra.mxu0 %v206
    %223 = vmatprep.subr.mxu0 0.0
    %224 = vmatpush1.msra.mxu0 0.0
    %225 = vmatprep.subr.mxu0 0.0
    %226 = vmatpush1.msra.mxu0 0.0
    %227 = vmatprep.subr.mxu0 0.0
    %228 = vmatpush1.msra.mxu0 0.0
    %229 = vmatprep.subr.mxu0 0.0
    %230 = vmatpush1.msra.mxu0 0.0
    %231 = vmatprep.subr.mxu0 0.0
    %232 = vmatpush1.msra.mxu0 0.0
    %233 = vmatprep.subr.mxu0 0.0
    %234 = vmatpush1.msra.mxu0 0.0
    %235 = vmatprep.subr.mxu0 0.0
    %236 = vmatpush1.msra.mxu0 0.0
    %237 = vmatprep.subr.mxu0 0.0
    %238 = vmatpush1.msra.mxu0 0.0
    %239 = vmatprep.subr.mxu0 0.0
    %240 = vmatpush1.msra.mxu0 0.0
    %241 = vmatprep.subr.mxu0 0.0
    %242 = vmatpush1.msra.mxu0 0.0
    %243 = vmatprep.subr.mxu0 0.0
    %244 = vmatpush1.msra.mxu0 0.0
    %245 = vmatprep.subr.mxu0 0.0
    %246 = vmatpush1.msra.mxu0 0.0
    %247 = vmatprep.subr.mxu0 0.0
    %248 = vmatpush1.msra.mxu0 0.0
    %249 = vmatprep.subr.mxu0 0.0
    %250 = vmatpush1.msra.mxu0 0.0
    %251 = vmatprep.subr.mxu0 0.0
    %252 = vmatpush1.msra.mxu0 0.0
    %253 = vmatprep.subr.mxu0 0.0
    %254 = vmatpush1.msra.mxu0 0.0
    %255 = vmatprep.subr.mxu0 0.0
    %256 = vmatpush1.msra.mxu0 0.0
    %257 = vmatprep.subr.mxu0 0.0
    %258 = vmatpush1.msra.mxu0 0.0
    %259 = vmatprep.subr.mxu0 0.0
    %260 = vmatpush1.msra.mxu0 0.0
    %261 = vmatprep.subr.mxu0 0.0
    %262 = vmatpush1.msra.mxu0 0.0
    %263 = vmatprep.subr.mxu0 0.0
    %264 = vmatpush1.msra.mxu0 0.0
    %265 = vmatprep.subr.mxu0 0.0
    %266 = vmatpush1.msra.mxu0 0.0
    %267 = vmatprep.subr.mxu0 0.0
    %268 = vmatpush1.msra.mxu0 0.0
    %269 = vmatprep.subr.mxu0 0.0
    %270 = vmatpush1.msra.mxu0 0.0
    %271 = vmatprep.subr.mxu0 0.0
    %272 = vmatpush1.msra.mxu0 0.0
    %273 = vmatprep.subr.mxu0 0.0
    %274 = vmatpush1.msra.mxu0 0.0
    %275 = vmatprep.subr.mxu0 0.0
    %276 = vmatpush1.msra.mxu0 0.0
    %277 = vmatprep.subr.mxu0 0.0
    %278 = vmatpush1.msra.mxu0 0.0
    %279 = vmatprep.mubr.f32.mxu0 0.0
    %280 = vmatmul.mubr.f32.gmra.mrb[0].mxu0 %v213
    %v281 = vpop.f32.mrb[0].mxu0
    %v282 = vadd.f32 %v211, %v281
    %v283 = vpop.f32.mrb[0].mxu0
    %284 = vdwg.mxu0
    %v285 = vmax.f32 %v282, -20.0
    %v286 = vmin.f32 %v285, 2.0
    %v287 = vmul.f32 %v286, 1.442695
    %v288 = vpow.pop %v287
    %v289 = vlaneseq
    %v290 = vand.u32 %v289, 127
    %vm291 = vcmp.lt.s32.totalorder %v290, 2
    %v292 = vsel %vm291, %v282, %v288
    %vm293 = vcmask 31744
    %294 = vst.msk [vmem:[%s2] sm:$0xff] %vm293, %v292
    // Predicated region
    $region18: #{tpu_custom_call.1} parent=1 // pred_check
      _
    $region19: #{tpu_custom_call.1} parent=1 // pred_check_branch
      %296 = sbr.rel (0) target = $region21
    $region20: #{tpu_custom_call.1} parent=1 // pred_region
      _
    $region21: #{tpu_custom_call.1} parent=1 // pred_fallthru
      _
    // Predicated region
    $region22: #{tpu_custom_call.1} parent=1 // pred_check
      _
    $region23: #{tpu_custom_call.1} parent=1 // pred_check_branch
      %298 = sbr.rel (0) target = $region25
    $region24: #{tpu_custom_call.1} parent=1 // pred_region
      _
    $region25: #{tpu_custom_call.1} parent=1 // pred_fallthru
      _
    %299 = vsyncpa [#allocation3], 1
    %300 = vsyncpa [#allocation5], 1

</llo_original>
